<compile_context>
chip_gen: v5e
topology: v5e:2x2
jax: 0.10.0
libtpu: 0.0.40
codegen_flags: <defaults>
</compile_context>

<pallas_src>
import jax
import jax.numpy as jnp
from jax.experimental import pallas as pl
from jax.experimental.pallas import tpu as pltpu

IN_FEATURES = 10
OUT_FEATURES = 10


def _round_up(n, m):
    return ((n + m - 1) // m) * m


def linear_kernel(x_ref, w_ref, b_ref, o_ref):
    # x_ref: (TB, IN), w_ref: (IN, OUT) [pre-transposed W], b_ref: (1, OUT) f32,
    # o_ref: (TB, OUT).  Mosaic lane-pads the narrow feature dims in VMEM only.
    y = jnp.dot(x_ref[...], w_ref[...], preferred_element_type=jnp.float32)
    o_ref[...] = (y + b_ref[...]).astype(o_ref.dtype)


def linear_pallas(x, weight, bias, *, block_b=4096):
    """y = x @ weight.T + bias, via a batch-tiled Pallas kernel.

    x:      (B, IN_FEATURES)
    weight: (OUT_FEATURES, IN_FEATURES)   -- torch.nn.Linear layout
    bias:   (OUT_FEATURES,)
    """
    B, in_f = x.shape
    out_f, in_f2 = weight.shape
    assert in_f == IN_FEATURES and in_f2 == IN_FEATURES and out_f == OUT_FEATURES

    # Batch tile: multiple of 8 (sublane rule), at most block_b rows, at most
    # the (8-rounded) batch, and small enough that batches > 8 rows produce at
    # least 2 grid steps (keeps both v7x TensorCores busy via "parallel").
    TB = max(8, (block_b // 8) * 8)
    if B > 8:
        TB = min(TB, _round_up(-(-B // 2), 8))
    TB = min(TB, _round_up(B, 8))
    Bp = _round_up(B, TB)

    # Wrapper-side work is limited to: pre-transposing the 10x10 weight,
    # reshaping the bias to a (1, 10) f32 row, and (only if needed) padding
    # the batch dim of x up to a tile multiple.  No feature-dim padding.
    w_t = weight.T                                   # (IN, OUT)
    b_row = bias.reshape(1, OUT_FEATURES).astype(jnp.float32)
    x_p = x if Bp == B else jnp.pad(x, ((0, Bp - B), (0, 0)))

    grid = (Bp // TB,)

    # Advisory cost: real (unpadded) flops and bytes so XLA can schedule/overlap.
    itemsize = jnp.dtype(x.dtype).itemsize
    cost = pl.CostEstimate(
        flops=2 * B * IN_FEATURES * OUT_FEATURES,
        transcendentals=0,
        bytes_accessed=(B * IN_FEATURES + IN_FEATURES * OUT_FEATURES
                        + OUT_FEATURES + B * OUT_FEATURES) * itemsize,
    )

    out = pl.pallas_call(
        linear_kernel,
        out_shape=jax.ShapeDtypeStruct((Bp, OUT_FEATURES), x.dtype),
        grid=grid,
        in_specs=[
            # Batch-marching activation tile; last dim = full array dim (10).
            pl.BlockSpec((TB, IN_FEATURES), lambda i: (i, 0)),
            # Weight / bias: same block every step -> stay VMEM-resident.
            pl.BlockSpec((IN_FEATURES, OUT_FEATURES), lambda i: (0, 0)),
            pl.BlockSpec((1, OUT_FEATURES), lambda i: (0, 0)),
        ],
        out_specs=pl.BlockSpec((TB, OUT_FEATURES), lambda i: (i, 0)),
        compiler_params=pltpu.CompilerParams(
            # Batch axis is independent: lets v7x shard it across both TCs.
            dimension_semantics=("parallel",),
        ),
        cost_estimate=cost,
    )(x_p, w_t, b_row)

    # Only a batch slice when the batch was padded; no feature slice needed.
    return out if Bp == B else out[:B]


def init_params(key):
    # Deterministic init mimicking torch.nn.Linear defaults:
    # weight, bias ~ U(-1/sqrt(in), 1/sqrt(in))
    kw, kb = jax.random.split(key)
    bound = 1.0 / jnp.sqrt(jnp.float32(IN_FEATURES))
    weight = jax.random.uniform(
        kw, (OUT_FEATURES, IN_FEATURES), jnp.float32, -bound, bound
    )
    bias = jax.random.uniform(kb, (OUT_FEATURES,), jnp.float32, -bound, bound)
    return weight, bias


if __name__ == "__main__":
    key = jax.random.PRNGKey(0)
    kx, kx2, kx3, kp = jax.random.split(key, 4)
    weight, bias = init_params(kp)

    # Small case (single-block grid).
    batch = 8
    x = jax.random.normal(kx, (batch, IN_FEATURES), jnp.float32)
    y = jax.block_until_ready(linear_pallas(x, weight, bias))
    y_ref = x @ weight.T + bias
    assert y.shape == (batch, OUT_FEATURES)
    assert jnp.allclose(y, y_ref, atol=1e-5, rtol=1e-5)

    # Multi-block batch-tiled case (exercises the "parallel" batch grid).
    batch2 = 48
    x2 = jax.random.normal(kx2, (batch2, IN_FEATURES), jnp.float32)
    y2 = jax.block_until_ready(linear_pallas(x2, weight, bias, block_b=16))
    y2_ref = x2 @ weight.T + bias
    assert y2.shape == (batch2, OUT_FEATURES)
    assert jnp.allclose(y2, y2_ref, atol=1e-5, rtol=1e-5)

    # Ragged batch (needs batch padding + trailing batch slice only).
    batch3 = 30
    x3 = jax.random.normal(kx3, (batch3, IN_FEATURES), jnp.float32)
    y3 = jax.block_until_ready(linear_pallas(x3, weight, bias))
    y3_ref = x3 @ weight.T + bias
    assert y3.shape == (batch3, OUT_FEATURES)
    assert jnp.allclose(y3, y3_ref, atol=1e-5, rtol=1e-5)

    print("KERNEL_OK")
</pallas_src>

<mosaic_0001>
module attributes {stable_mosaic.version = 11 : i64} {
  func.func @linear_kernel(%arg0: i32, %arg1: memref<8x10xf32, #tpu.memory_space<vmem>>, %arg2: memref<10x10xf32, #tpu.memory_space<vmem>>, %arg3: memref<1x10xf32, #tpu.memory_space<vmem>>, %arg4: memref<8x10xf32, #tpu.memory_space<vmem>>) attributes {dimension_semantics = [#tpu.dimension_semantics<parallel>], iteration_bounds = array<i64: 1>, scalar_prefetch = 0 : i64, scratch_operands = 0 : i64, tpu.core_type = #tpu.core_type<tc>, window_params = [{transform_indices = @transform_0, window_bounds = array<i64: 8, 10>}, {pipeline_mode = #tpu.pipeline_mode<synchronous>, transform_indices = @transform_1, window_bounds = array<i64: 10, 10>}, {pipeline_mode = #tpu.pipeline_mode<synchronous>, transform_indices = @transform_2, window_bounds = array<i64: 1, 10>}, {transform_indices = @transform_3, window_bounds = array<i64: 8, 10>}]} {
    %c0 = arith.constant 0 : index
    %c0_0 = arith.constant 0 : index
    %0 = vector.load %arg1[%c0, %c0_0] : memref<8x10xf32, #tpu.memory_space<vmem>>, vector<8x10xf32>
    %c0_1 = arith.constant 0 : index
    %c0_2 = arith.constant 0 : index
    %1 = vector.load %arg2[%c0_1, %c0_2] : memref<10x10xf32, #tpu.memory_space<vmem>>, vector<10x10xf32>
    %cst = arith.constant dense<0.000000e+00> : vector<8x10xf32>
    %2 = tpu.matmul %0, %1, %cst {dimension_numbers = #tpu.dot_dimension_numbers<[1], [0], [0], [1], [0, 0, 1, 1], [], []>} : vector<8x10xf32>, vector<10x10xf32>, vector<8x10xf32> -> vector<8x10xf32>
    %c0_3 = arith.constant 0 : index
    %c0_4 = arith.constant 0 : index
    %3 = vector.load %arg3[%c0_3, %c0_4] : memref<1x10xf32, #tpu.memory_space<vmem>>, vector<1x10xf32>
    %4 = vector.broadcast %3 : vector<1x10xf32> to vector<8x10xf32>
    %5 = arith.addf %2, %4 : vector<8x10xf32>
    %c0_5 = arith.constant 0 : index
    %c0_6 = arith.constant 0 : index
    %6 = vector.load %arg4[%c0_5, %c0_6] : memref<8x10xf32, #tpu.memory_space<vmem>>, vector<8x10xf32>
    tpu.vector_store %arg4[%c0_5, %c0_6], %5 {strides = array<i32>} : memref<8x10xf32, #tpu.memory_space<vmem>>, vector<8x10xf32>,
    return
  }
  func.func @transform_0(%arg0: i32) -> (i32, i32) {
    %c0_i32 = arith.constant 0 : i32
    %c0_i32_0 = arith.constant 0 : i32
    return %arg0, %c0_i32 : i32, i32
  }
  func.func @transform_1(%arg0: i32) -> (i32, i32) {
    %c0_i32 = arith.constant 0 : i32
    %c0_i32_0 = arith.constant 0 : i32
    %c0_i32_1 = arith.constant 0 : i32
    return %c0_i32, %c0_i32_0 : i32, i32
  }
  func.func @transform_2(%arg0: i32) -> (i32, i32) {
    %c0_i32 = arith.constant 0 : i32
    %c0_i32_0 = arith.constant 0 : i32
    %c0_i32_1 = arith.constant 0 : i32
    return %c0_i32, %c0_i32_0 : i32, i32
  }
  func.func @transform_3(%arg0: i32) -> (i32, i32) {
    %c0_i32 = arith.constant 0 : i32
    %c0_i32_0 = arith.constant 0 : i32
    return %arg0, %c0_i32 : i32, i32
  }
}

</mosaic_0001>

<llo_original>
// kernel: tpu_custom_call.1
$region0: #{tpu_custom_call.1}
  #allocation0 [shape = 'u32[]', space=smem, size = 0x4, offset = 0x4, fixed_abs, tag = 'smem constant byte address 0x4 - core index']
  #allocation1 [shape = 'u32[72,128]{1,0:T(1,128)}', space=vmem, size = 0x9000, scoped, tag = 'internal scratch']
  %s0 = inlined_call_operand.hbm [shape: f32[8,10], index: 0, kind: input, shape index: {}]
  %s1 = inlined_call_operand.hbm [shape: f32[10,10], index: 1, kind: input, shape index: {}]
  %s2 = inlined_call_operand.vmem [shape: f32[1,10], index: 2, kind: input, shape index: {}]
  %s3 = inlined_call_operand.hbm [shape: f32[8,10], index: 3, kind: output, shape index: {}]
  %s4 = sld [smem:[#allocation0]]
  $region30: #{tpu_custom_call.1} parent=0
    _
  %s6 = ssub.s32 1, %s4
  %s7 = scalar_select 0, %s6, %s4
  $region1: #{tpu_custom_call.1} parent=0
    #allocation2 [shape = 'u8[4096]{0}', space=vmem, size = 0x1000, scoped, tag = 'input window, operand 0, single buffered']
    #allocation3 [shape = 's32[1]{0}', space=sflag, size = 0x4, scoped, tag = 'scoped memory for tpu_custom_call.1']
    #allocation4 [shape = 's32[1]{0}', space=sflag, size = 0x4, scoped, tag = 'scoped memory for tpu_custom_call.1']
    #allocation5 [shape = 'u8[8192]{0}', space=vmem, size = 0x2000, scoped, tag = 'input window, operand 1, single buffered']
    #allocation6 [shape = 's32[1]{0}', space=sflag, size = 0x4, scoped, tag = 'scoped memory for tpu_custom_call.1']
    #allocation7 [shape = 'u8[4096]{0}', space=vmem, size = 0x1000, scoped, tag = 'output window, operand 0, single buffered']
    %8 = vsyncpa [#allocation3], 0
    %9 = vsyncpa [#allocation6], 0
    %10 = vsyncpa [#allocation4], 0
    // Predicated region
    $region2: #{tpu_custom_call.1} parent=1 // pred_check
      _
    $region3: #{tpu_custom_call.1} parent=1 // pred_check_branch
      %12 = sbr.rel (0) target = $region5
    $region4: #{tpu_custom_call.1} parent=1 // pred_region
      %14 = vsyncadd [#allocation3], 0
      %s16 = sshll.u32 %s0, 4
      %s17 = int_to_ptr.hbm [resolvable:$true] %s16
      %s18 = sshll.u32 [#allocation2], 4
      %s19 = int_to_ptr.vmem [resolvable:$true] %s18
      %21 = dma.hbm_to_vmem [thread:$0]  %s17, 128, %s19, [#allocation3]
    $region5: #{tpu_custom_call.1} parent=1 // pred_fallthru
      _
    // Predicated region
    $region6: #{tpu_custom_call.1} parent=1 // pred_check
      _
    $region7: #{tpu_custom_call.1} parent=1 // pred_check_branch
      %23 = sbr.rel (0) target = $region9
    $region8: #{tpu_custom_call.1} parent=1 // pred_region
      %25 = vsyncadd [#allocation6], 0
      %s26 = sshll.u32 %s1, 4
      %s27 = int_to_ptr.hbm [resolvable:$true] %s26
      %s28 = sshll.u32 [#allocation5], 4
      %s29 = int_to_ptr.vmem [resolvable:$true] %s28
      %34 = dma.hbm_to_vmem [thread:$0]  %s27, 256, %s29, [#allocation6], 128, 128, 8
    $region9: #{tpu_custom_call.1} parent=1 // pred_fallthru
      _
    // Predicated region
    $region10: #{tpu_custom_call.1} parent=1 // pred_check
      _
    $region11: #{tpu_custom_call.1} parent=1 // pred_check_branch
      %36 = sbr.rel (0) target = $region13
    $region12: #{tpu_custom_call.1} parent=1 // pred_region
      _
    $region13: #{tpu_custom_call.1} parent=1 // pred_fallthru
      _
    // Predicated region
    $region14: #{tpu_custom_call.1} parent=1 // pred_check
      _
    $region15: #{tpu_custom_call.1} parent=1 // pred_check_branch
      %38 = sbr.rel (0) target = $region17
    $region16: #{tpu_custom_call.1} parent=1 // pred_region
      %40 = dma.done [#allocation3], 128
    $region17: #{tpu_custom_call.1} parent=1 // pred_fallthru
      _
    // Predicated region
    $region18: #{tpu_custom_call.1} parent=1 // pred_check
      _
    $region19: #{tpu_custom_call.1} parent=1 // pred_check_branch
      %42 = sbr.rel (0) target = $region21
    $region20: #{tpu_custom_call.1} parent=1 // pred_region
      %44 = dma.done [#allocation6], 256
    $region21: #{tpu_custom_call.1} parent=1 // pred_fallthru
      _
    %v45 = vld [vmem:[#allocation2] sm:$0xff]
    %v46 = vld [vmem:[#allocation5] sm:$0xff]
    %v47 = vld [vmem:[#allocation5 + $0x8] sm:$0x3]
    %v48 = vld [vmem:[%s2] sm:$0x1]
    %v50 = vperm.slane %v48, 0
    %vm52 = vcmask 80896
    %v54 = vsel %vm52, %v45, 0
    %vm56 = vcmask 1041408
    %v58 = vsel %vm56, %v47, 0
    %60 = vmatpush.msra.mxu0 0.0
    %61 = vmatpush.msra.mxu0 0.0
    %62 = vmatpush.msra.mxu0 0.0
    %63 = vmatpush.msra.mxu0 0.0
    %64 = vmatpush.msra.mxu0 0.0
    %65 = vmatpush.msra.mxu0 0.0
    %66 = vmatpush.msra.mxu0 0.0
    %67 = vmatpush.msra.mxu0 0.0
    %68 = vmatpush.msra.mxu0 0.0
    %69 = vmatpush.msra.mxu0 0.0
    %70 = vmatpush.msra.mxu0 0.0
    %71 = vmatpush.msra.mxu0 0.0
    %72 = vmatpush.msra.mxu0 0.0
    %73 = vmatpush.msra.mxu0 0.0
    %74 = vmatpush.msra.mxu0 %v58
    %75 = vmatpush.msra.mxu0 %v46
    %76 = vmatmul.f32.gmra.mxu0 %v54
    %v77 = vpop.f32.mrf.mxu0
    %v78 = vadd.f32 %v50, %v77
    %79 = vdwg.mxu0
    %80 = vst.msk [vmem:[#allocation7] sm:$0xff] %vm52, %v78
    // Predicated region
    $region22: #{tpu_custom_call.1} parent=1 // pred_check
      _
    $region23: #{tpu_custom_call.1} parent=1 // pred_check_branch
      %82 = sbr.rel (0) target = $region25
    $region24: #{tpu_custom_call.1} parent=1 // pred_region
      %84 = vsyncadd [#allocation4], 0
      %s86 = sshll.u32 [#allocation7], 4
      %s87 = int_to_ptr.vmem [resolvable:$true] %s86
      %s88 = sshll.u32 %s3, 4
      %s89 = int_to_ptr.hbm [resolvable:$true] %s88
      %91 = dma.vmem_to_hbm [thread:$0]  %s87, 128, %s89, [#allocation4]
    $region25: #{tpu_custom_call.1} parent=1 // pred_fallthru
      _
    // Predicated region
    $region26: #{tpu_custom_call.1} parent=1 // pred_check
      _
    $region27: #{tpu_custom_call.1} parent=1 // pred_check_branch
      %93 = sbr.rel (0) target = $region29
    $region28: #{tpu_custom_call.1} parent=1 // pred_region
      %95 = dma.done [#allocation4], 128
    $region29: #{tpu_custom_call.1} parent=1 // pred_fallthru
      _
    %96 = vsyncpa [#allocation3], 1
    %97 = vsyncpa [#allocation6], 1
    %98 = vsyncpa [#allocation4], 1

</llo_original>
